<compile_context>
chip_gen: v6e
topology: v6e:2x2x1
jax: 0.10.0
libtpu: 0.0.40
codegen_flags: <defaults>
</compile_context>

<pallas_src>
import functools

import jax
import jax.numpy as jnp
from jax.experimental import pallas as pl
from jax.experimental.pallas import tpu as pltpu


# --------------------------------------------------------------------------- #
# Kernel
# --------------------------------------------------------------------------- #
def _mlp_kernel(x_ref, w1_ref, b1_ref, w2_ref, b2_ref, w3_ref, b3_ref, o_ref):
    # x arrives as f32 straight from HBM; cast the tile to the weight dtype
    # (bf16) in-kernel so the MXU runs native bf16 matmuls, f32 accumulate.
    x = x_ref[...].astype(w1_ref.dtype)

    # Layer 1: Linear + ReLU   (Dropout == identity in eval mode).
    h1 = jnp.dot(x, w1_ref[...], preferred_element_type=jnp.float32)
    h1 = jnp.maximum(h1 + b1_ref[...], 0.0)

    # Layer 2: Linear + ReLU.  Bias-add / ReLU stay f32 (no bf16 VALU on v5e).
    h2 = jnp.dot(h1.astype(w2_ref.dtype), w2_ref[...],
                 preferred_element_type=jnp.float32)
    h2 = jnp.maximum(h2 + b2_ref[...], 0.0)

    # Output layer: Linear.
    out = jnp.dot(h2.astype(w3_ref.dtype), w3_ref[...],
                  preferred_element_type=jnp.float32)
    o_ref[...] = (out + b3_ref[...]).astype(o_ref.dtype)


# --------------------------------------------------------------------------- #
# Tile selection
# --------------------------------------------------------------------------- #
_MAX_BATCH_TILE = 2048   # diminishing returns beyond ~1-2K rows (per-step
                         # overhead already amortized to <1%)


def _round_up(v, m):
    return ((v + m - 1) // m) * m


def _vmem_pipeline_budget_bytes():
    """Chip-aware budget for the pipelined (double-buffered) x / out tiles.

    Kept well under the default scoped VMEM limit (16 MiB v5e, 32 MiB
    v6e/v7x) so no vmem_limit_bytes override is needed.
    """
    try:
        cap = pltpu.get_tpu_info().vmem_capacity_bytes
    except Exception:  # pragma: no cover - e.g. interpret mode / older jax
        cap = 64 << 20  # conservative (v7x per-TC VMEM)
    return min(cap // 8, 12 << 20)


def _select_batch_tile(n, in_ch, h1, h2, nc, block_n):
    """Pick the batch tile: biggest multiple of 8 that fits the VMEM budget,
    never (much) larger than the batch itself."""
    if block_n is not None:
        tb = max(8, _round_up(block_n, 8))
    else:
        lane = 128
        per_row_bytes = (
            2 * in_ch * 4                      # x tile (f32), double-buffered
            + 2 * _round_up(nc, lane) * 4      # out tile (<=f32), double-buffered
            + (_round_up(h1, lane) + _round_up(h2, lane)) * 4  # intermediates
        )
        tb = _vmem_pipeline_budget_bytes() // max(per_row_bytes, 1)
        tb = max(8, min(_MAX_BATCH_TILE, (tb // 8) * 8))
    return min(tb, _round_up(n, 8))


# --------------------------------------------------------------------------- #
# Forward
# --------------------------------------------------------------------------- #
def prepare_params(params):
    """One-time (outside-jit) conversion: weights -> bf16 for the MXU streams,
    biases -> (1, out) f32 rows.  Weights are (in_features, out_features),
    i.e. the transpose of PyTorch's Linear.weight."""
    return {
        "w1": params["w1"].astype(jnp.bfloat16),
        "b1": params["b1"].reshape(1, -1).astype(jnp.float32),
        "w2": params["w2"].astype(jnp.bfloat16),
        "b2": params["b2"].reshape(1, -1).astype(jnp.float32),
        "w3": params["w3"].astype(jnp.bfloat16),
        "b3": params["b3"].reshape(1, -1).astype(jnp.float32),
    }


@functools.partial(jax.jit, static_argnames=("block_n", "out_dtype"))
def classifier_mlp_forward(x, prepared_params, block_n=None,
                           out_dtype=jnp.float32):
    """x: (N, in_ch) float32.  prepared_params: output of prepare_params()."""
    w1, b1 = prepared_params["w1"], prepared_params["b1"]
    w2, b2 = prepared_params["w2"], prepared_params["b2"]
    w3, b3 = prepared_params["w3"], prepared_params["b3"]

    n, in_ch = x.shape
    h1 = w1.shape[1]
    h2 = w2.shape[1]
    nc = w3.shape[1]

    tb = _select_batch_tile(n, in_ch, h1, h2, nc, block_n)
    grid = (pl.cdiv(n, tb),)   # partial final block masked by Pallas (no pad)

    out_bytes = jnp.dtype(out_dtype).itemsize
    flops = 2 * n * (in_ch * h1 + h1 * h2 + h2 * nc)
    bytes_accessed = (
        n * in_ch * 4                               # x read (f32, streamed once)
        + n * nc * out_bytes                        # output write
        + (in_ch * h1 + h1 * h2 + h2 * nc) * 2      # weights (bf16, resident)
        + (h1 + h2 + nc) * 4                        # biases (f32)
    )

    out = pl.pallas_call(
        _mlp_kernel,
        out_shape=jax.ShapeDtypeStruct((n, nc), out_dtype),
        grid_spec=pltpu.PrefetchScalarGridSpec(
            num_scalar_prefetch=0,
            grid=grid,
            in_specs=[
                pl.BlockSpec((tb, in_ch), lambda i: (i, 0)),   # x tile (f32)
                pl.BlockSpec((in_ch, h1), lambda i: (0, 0)),   # w1 (resident)
                pl.BlockSpec((1, h1), lambda i: (0, 0)),       # b1
                pl.BlockSpec((h1, h2), lambda i: (0, 0)),      # w2 (resident)
                pl.BlockSpec((1, h2), lambda i: (0, 0)),       # b2
                pl.BlockSpec((h2, nc), lambda i: (0, 0)),      # w3 (resident)
                pl.BlockSpec((1, nc), lambda i: (0, 0)),       # b3
            ],
            out_specs=pl.BlockSpec((tb, nc), lambda i: (i, 0)),
        ),
        compiler_params=pltpu.CompilerParams(
            dimension_semantics=("parallel",),
        ),
        cost_estimate=pl.CostEstimate(
            flops=flops, transcendentals=0, bytes_accessed=bytes_accessed),
    )(x, w1, b1, w2, b2, w3, b3)

    return out


# --------------------------------------------------------------------------- #
# Params / references
# --------------------------------------------------------------------------- #
def init_params(key, in_ch, layers_description=(256, 128), num_classes=10):
    """Deterministic init mimicking PyTorch nn.Linear default:
    U(-1/sqrt(fan_in), 1/sqrt(fan_in)) for both weight and bias.
    Weights stored as (in_features, out_features)."""
    dims = [in_ch] + list(layers_description) + [num_classes]
    params = {}
    names = [("w1", "b1"), ("w2", "b2"), ("w3", "b3")]
    for idx, (wn, bn) in enumerate(names):
        fan_in, fan_out = dims[idx], dims[idx + 1]
        key, kw, kb = jax.random.split(key, 3)
        bound = 1.0 / jnp.sqrt(fan_in)
        params[wn] = jax.random.uniform(
            kw, (fan_in, fan_out), jnp.float32, minval=-bound, maxval=bound)
        params[bn] = jax.random.uniform(
            kb, (fan_out,), jnp.float32, minval=-bound, maxval=bound)
    return params


def reference_forward_bf16(x, params):
    """Precision-matched reference (bf16 matmul inputs, f32 accumulation)."""
    w1 = params["w1"].astype(jnp.bfloat16)
    w2 = params["w2"].astype(jnp.bfloat16)
    w3 = params["w3"].astype(jnp.bfloat16)
    h1 = jnp.dot(x.astype(jnp.bfloat16), w1,
                 preferred_element_type=jnp.float32) + params["b1"]
    h1 = jnp.maximum(h1, 0.0)
    h2 = jnp.dot(h1.astype(jnp.bfloat16), w2,
                 preferred_element_type=jnp.float32) + params["b2"]
    h2 = jnp.maximum(h2, 0.0)
    return jnp.dot(h2.astype(jnp.bfloat16), w3,
                   preferred_element_type=jnp.float32) + params["b3"]


def reference_forward_f32(x, params):
    h1 = jnp.maximum(x @ params["w1"] + params["b1"], 0.0)
    h2 = jnp.maximum(h1 @ params["w2"] + params["b2"], 0.0)
    return h2 @ params["w3"] + params["b3"]


# --------------------------------------------------------------------------- #
# Self-test
# --------------------------------------------------------------------------- #
if __name__ == "__main__":
    key = jax.random.PRNGKey(0)
    k_x, k_p = jax.random.split(key)

    in_ch = 32
    num_classes = 10
    params = init_params(k_p, in_ch, layers_description=(256, 128),
                         num_classes=num_classes)
    prepared = prepare_params(params)   # one-time, outside the jitted forward

    # (batch, block_n) cases:
    #  - (32, 8):   multi-step grid (4 tiles)
    #  - (13, None): single partial block (13 rows of a 16-row tile, masked)
    #  - (32, None): single full block, auto tile
    for batch, blk in ((32, 8), (13, None), (32, None)):
        x = jax.random.normal(jax.random.fold_in(k_x, batch),
                              (batch, in_ch), jnp.float32)
        out = jax.block_until_ready(
            classifier_mlp_forward(x, prepared, block_n=blk))
        assert out.shape == (batch, num_classes)
        assert out.dtype == jnp.float32

        ref_bf = reference_forward_bf16(x, params)
        ref_f32 = reference_forward_f32(x, params)
        assert jnp.allclose(out, ref_bf, atol=1e-2, rtol=1e-2), \
            "mismatch vs precision-matched (bf16) reference"
        assert jnp.allclose(out, ref_f32, atol=5e-2, rtol=5e-2), \
            "mismatch vs f32 reference"

    # bf16-output path (halves the writeback stream; opt-in).
    x = jax.random.normal(jax.random.fold_in(k_x, 99), (32, in_ch), jnp.float32)
    out_bf = jax.block_until_ready(
        classifier_mlp_forward(x, prepared, out_dtype=jnp.bfloat16))
    assert out_bf.dtype == jnp.bfloat16
    assert jnp.allclose(out_bf.astype(jnp.float32),
                        reference_forward_bf16(x, params),
                        atol=5e-2, rtol=5e-2)

    print("KERNEL_OK")
</pallas_src>

<mosaic_0001>
module attributes {stable_mosaic.version = 11 : i64} {
  func.func @_mlp_kernel(%arg0: i32, %arg1: memref<8x32xf32, #tpu.memory_space<vmem>>, %arg2: memref<32x256xbf16, #tpu.memory_space<vmem>>, %arg3: memref<1x256xf32, #tpu.memory_space<vmem>>, %arg4: memref<256x128xbf16, #tpu.memory_space<vmem>>, %arg5: memref<1x128xf32, #tpu.memory_space<vmem>>, %arg6: memref<128x10xbf16, #tpu.memory_space<vmem>>, %arg7: memref<1x10xf32, #tpu.memory_space<vmem>>, %arg8: memref<8x10xf32, #tpu.memory_space<vmem>>) attributes {dimension_semantics = [#tpu.dimension_semantics<parallel>], iteration_bounds = array<i64: 4>, scalar_prefetch = 0 : i64, scratch_operands = 0 : i64, tpu.core_type = #tpu.core_type<tc>, window_params = [{transform_indices = @transform_0, window_bounds = array<i64: 8, 32>}, {pipeline_mode = #tpu.pipeline_mode<synchronous>, transform_indices = @transform_1, window_bounds = array<i64: 32, 256>}, {pipeline_mode = #tpu.pipeline_mode<synchronous>, transform_indices = @transform_2, window_bounds = array<i64: 1, 256>}, {pipeline_mode = #tpu.pipeline_mode<synchronous>, transform_indices = @transform_3, window_bounds = array<i64: 256, 128>}, {pipeline_mode = #tpu.pipeline_mode<synchronous>, transform_indices = @transform_4, window_bounds = array<i64: 1, 128>}, {pipeline_mode = #tpu.pipeline_mode<synchronous>, transform_indices = @transform_5, window_bounds = array<i64: 128, 10>}, {pipeline_mode = #tpu.pipeline_mode<synchronous>, transform_indices = @transform_6, window_bounds = array<i64: 1, 10>}, {transform_indices = @transform_7, window_bounds = array<i64: 8, 10>}]} {
    %c0 = arith.constant 0 : index
    %c0_0 = arith.constant 0 : index
    %0 = vector.load %arg1[%c0, %c0_0] : memref<8x32xf32, #tpu.memory_space<vmem>>, vector<8x32xf32>
    %1 = arith.truncf %0 : vector<8x32xf32> to vector<8x32xbf16>
    %c0_1 = arith.constant 0 : index
    %c0_2 = arith.constant 0 : index
    %2 = vector.load %arg2[%c0_1, %c0_2] : memref<32x256xbf16, #tpu.memory_space<vmem>>, vector<32x256xbf16>
    %cst = arith.constant dense<0.000000e+00> : vector<8x256xf32>
    %3 = tpu.matmul %1, %2, %cst {dimension_numbers = #tpu.dot_dimension_numbers<[1], [0], [0], [1], [0, 0, 1, 1], [], []>} : vector<8x32xbf16>, vector<32x256xbf16>, vector<8x256xf32> -> vector<8x256xf32>
    %c0_3 = arith.constant 0 : index
    %c0_4 = arith.constant 0 : index
    %4 = vector.load %arg3[%c0_3, %c0_4] : memref<1x256xf32, #tpu.memory_space<vmem>>, vector<1x256xf32>
    %5 = vector.broadcast %4 : vector<1x256xf32> to vector<8x256xf32>
    %6 = arith.addf %3, %5 : vector<8x256xf32>
    %cst_5 = arith.constant 0.000000e+00 : f32
    %7 = vector.broadcast %cst_5 : f32 to vector<8x256xf32>
    %8 = arith.maximumf %6, %7 : vector<8x256xf32>
    %9 = arith.truncf %8 : vector<8x256xf32> to vector<8x256xbf16>
    %c0_6 = arith.constant 0 : index
    %c0_7 = arith.constant 0 : index
    %10 = vector.load %arg4[%c0_6, %c0_7] : memref<256x128xbf16, #tpu.memory_space<vmem>>, vector<256x128xbf16>
    %cst_8 = arith.constant dense<0.000000e+00> : vector<8x128xf32>
    %11 = tpu.matmul %9, %10, %cst_8 {dimension_numbers = #tpu.dot_dimension_numbers<[1], [0], [0], [1], [0, 0, 1, 1], [], []>} : vector<8x256xbf16>, vector<256x128xbf16>, vector<8x128xf32> -> vector<8x128xf32>
    %c0_9 = arith.constant 0 : index
    %c0_10 = arith.constant 0 : index
    %12 = vector.load %arg5[%c0_9, %c0_10] : memref<1x128xf32, #tpu.memory_space<vmem>>, vector<1x128xf32>
    %13 = vector.broadcast %12 : vector<1x128xf32> to vector<8x128xf32>
    %14 = arith.addf %11, %13 : vector<8x128xf32>
    %cst_11 = arith.constant 0.000000e+00 : f32
    %15 = vector.broadcast %cst_11 : f32 to vector<8x128xf32>
    %16 = arith.maximumf %14, %15 : vector<8x128xf32>
    %17 = arith.truncf %16 : vector<8x128xf32> to vector<8x128xbf16>
    %c0_12 = arith.constant 0 : index
    %c0_13 = arith.constant 0 : index
    %18 = vector.load %arg6[%c0_12, %c0_13] : memref<128x10xbf16, #tpu.memory_space<vmem>>, vector<128x10xbf16>
    %cst_14 = arith.constant dense<0.000000e+00> : vector<8x10xf32>
    %19 = tpu.matmul %17, %18, %cst_14 {dimension_numbers = #tpu.dot_dimension_numbers<[1], [0], [0], [1], [0, 0, 1, 1], [], []>} : vector<8x128xbf16>, vector<128x10xbf16>, vector<8x10xf32> -> vector<8x10xf32>
    %c0_15 = arith.constant 0 : index
    %c0_16 = arith.constant 0 : index
    %20 = vector.load %arg7[%c0_15, %c0_16] : memref<1x10xf32, #tpu.memory_space<vmem>>, vector<1x10xf32>
    %21 = vector.broadcast %20 : vector<1x10xf32> to vector<8x10xf32>
    %22 = arith.addf %19, %21 : vector<8x10xf32>
    %c0_17 = arith.constant 0 : index
    %c0_18 = arith.constant 0 : index
    %23 = vector.load %arg8[%c0_17, %c0_18] : memref<8x10xf32, #tpu.memory_space<vmem>>, vector<8x10xf32>
    tpu.vector_store %arg8[%c0_17, %c0_18], %22 {strides = array<i32>} : memref<8x10xf32, #tpu.memory_space<vmem>>, vector<8x10xf32>,
    return
  }
  func.func @transform_0(%arg0: i32) -> (i32, i32) {
    %c0_i32 = arith.constant 0 : i32
    %c0_i32_0 = arith.constant 0 : i32
    return %arg0, %c0_i32 : i32, i32
  }
  func.func @transform_1(%arg0: i32) -> (i32, i32) {
    %c0_i32 = arith.constant 0 : i32
    %c0_i32_0 = arith.constant 0 : i32
    %c0_i32_1 = arith.constant 0 : i32
    return %c0_i32, %c0_i32_0 : i32, i32
  }
  func.func @transform_2(%arg0: i32) -> (i32, i32) {
    %c0_i32 = arith.constant 0 : i32
    %c0_i32_0 = arith.constant 0 : i32
    %c0_i32_1 = arith.constant 0 : i32
    return %c0_i32, %c0_i32_0 : i32, i32
  }
  func.func @transform_3(%arg0: i32) -> (i32, i32) {
    %c0_i32 = arith.constant 0 : i32
    %c0_i32_0 = arith.constant 0 : i32
    %c0_i32_1 = arith.constant 0 : i32
    return %c0_i32, %c0_i32_0 : i32, i32
  }
  func.func @transform_4(%arg0: i32) -> (i32, i32) {
    %c0_i32 = arith.constant 0 : i32
    %c0_i32_0 = arith.constant 0 : i32
    %c0_i32_1 = arith.constant 0 : i32
    return %c0_i32, %c0_i32_0 : i32, i32
  }
  func.func @transform_5(%arg0: i32) -> (i32, i32) {
    %c0_i32 = arith.constant 0 : i32
    %c0_i32_0 = arith.constant 0 : i32
    %c0_i32_1 = arith.constant 0 : i32
    return %c0_i32, %c0_i32_0 : i32, i32
  }
  func.func @transform_6(%arg0: i32) -> (i32, i32) {
    %c0_i32 = arith.constant 0 : i32
    %c0_i32_0 = arith.constant 0 : i32
    %c0_i32_1 = arith.constant 0 : i32
    return %c0_i32, %c0_i32_0 : i32, i32
  }
  func.func @transform_7(%arg0: i32) -> (i32, i32) {
    %c0_i32 = arith.constant 0 : i32
    %c0_i32_0 = arith.constant 0 : i32
    return %arg0, %c0_i32 : i32, i32
  }
}

</mosaic_0001>

<llo_original>
// kernel: classifier_mlp_forward.1
$region0: #{classifier_mlp_forward.1}
  #allocation0 [shape = 'u32[]', space=smem, size = 0x4, offset = 0x4, fixed_abs, tag = 'smem constant byte address 0x4 - core index']
  #allocation1 [shape = 'u32[144,128]{1,0:T(1,128)}', space=vmem, size = 0x12000, scoped, tag = 'internal scratch']
  %s0 = inlined_call_operand.vmem [shape: f32[32,32], index: 0, kind: input, shape index: {}]
  %s1 = inlined_call_operand.vmem [shape: bf16[32,256], index: 1, kind: input, shape index: {}]
  %s2 = inlined_call_operand.vmem [shape: f32[1,256], index: 2, kind: input, shape index: {}]
  %s3 = inlined_call_operand.hbm [shape: bf16[256,128], index: 3, kind: input, shape index: {}]
  %s4 = inlined_call_operand.vmem [shape: f32[1,128], index: 4, kind: input, shape index: {}]
  %s5 = inlined_call_operand.vmem [shape: bf16[128,10], index: 5, kind: input, shape index: {}]
  %s6 = inlined_call_operand.vmem [shape: f32[1,10], index: 6, kind: input, shape index: {}]
  %s7 = inlined_call_operand.vmem [shape: f32[32,10], index: 7, kind: output, shape index: {}]
  %s8 = sld [smem:[#allocation0]]
  $region65: #{classifier_mlp_forward.1} parent=0
    _
  %s10 = ssub.s32 1, %s8
  %s11 = scalar_select 0, %s10, %s8
  $region1: #{classifier_mlp_forward.1} parent=0
    #allocation2 [shape = 'u8[65536]{0}', space=vmem, size = 0x10000, scoped, tag = 'input window, operand 3, single buffered']
    #allocation3 [shape = 's32[2]{0}', space=sflag, size = 0x8, scoped, tag = 'scoped memory for classifier_mlp_forward.1']
    %12 = vsyncpa [#allocation3], 0
    loop: start=0, step=1, limit=6
    $region2: #{classifier_mlp_forward.1} parent=1 // loop_pre_header
      _
    $region3: #{classifier_mlp_forward.1} parent=1 // loop_header
      %s14 = sphi 0, %s18
      %p15 = scmp.ge.s32.totalorder %s14, 6
      %s24 = sphi 0, %s26
      %s27 = sphi 0, %s24
      %s28 = sphi 0, %s27
      %s44 = sphi 0, %s28
      %s48 = sphi 0, %s48
      %s50 = sphi 0, %s48
      %s51 = sphi 0, %s50
      %s65 = sphi 0, %s51
      %s69 = sphi 0, %s69
      %s71 = sphi 0, %s69
      %s72 = sphi 0, %s71
      %s86 = sphi 0, %s72
      %s90 = sphi 0, %s90
      %s92 = sphi 0, %s90
      %s93 = sphi 0, %s92
      %s107 = sphi 0, %s93
      %s111 = sphi 0, %s111
      %s113 = sphi 0, %s111
      %s114 = sphi 0, %s113
      %s128 = sphi 0, %s114
      %s132 = sphi 0, %s132
      %s134 = sphi 0, %s132
      %s135 = sphi 0, %s134
      %s149 = sphi 0, %s135
      %s153 = sphi 0, %s153
      %s155 = sphi 0, %s153
      %s156 = sphi 0, %s155
      %s170 = sphi 0, %s156
      %s176 = sphi 0, %s178
      %s179 = sphi 0, %s176
      %s180 = sphi 0, %s179
      %s196 = sphi 0, %s180
    $region4: #{classifier_mlp_forward.1} parent=1 // loop_header_branch
      %17 = sbr.rel (%p15) target = $region8
    $region5: #{classifier_mlp_forward.1} parent=1 // loop_body
      %s19 = ssub.s32 %s14, 1
      %s20 = ssub.s32 %s14, 2
      %s21 = sadd.s32 %s14, 1
      %s22 = ssub.s32 %s14, %s21
      %p23 = scmp.eq.s32.totalorder %s22, 0
      %s25 = sadd.s32 %s24, 1
      %s26 = scalar_select %p23, %s24, %s25
      %p29 = pneg %p23
      %p30 = scmp.eq.s32.totalorder %s14, 3
      %p31 = por %p29, %p30
      %p32 = scmp.ne.s32.totalorder %s24, %s27
      %p33 = scmp.eq.s32.totalorder %s14, 0
      %p34 = por %p32, %p33
      %p35 = scmp.ne.s32.totalorder %s24, %s27
      %p36 = scmp.eq.s32.totalorder %s19, 3
      %p37 = por %p35, %p36
      %p38 = scmp.ne.s32.totalorder %s27, %s28
      %p39 = scmp.eq.s32.totalorder %s19, 0
      %p40 = por %p38, %p39
      %p41 = scmp.ne.s32.totalorder %s27, %s28
      %p42 = scmp.eq.s32.totalorder %s20, 3
      %p43 = por %p41, %p42
      %p45 = scmp.ne.s32.totalorder %s28, %s44
      %p46 = scmp.eq.s32.totalorder %s20, 0
      %p47 = por %p45, %p46
      %s49 = sadd.s32 %s48, 1
      %p52 = scmp.eq.s32.totalorder %s14, 3
      %p53 = scmp.ne.s32.totalorder %s48, %s50
      %p54 = scmp.eq.s32.totalorder %s14, 0
      %p55 = por %p53, %p54
      %p56 = scmp.ne.s32.totalorder %s48, %s50
      %p57 = scmp.eq.s32.totalorder %s19, 3
      %p58 = por %p56, %p57
      %p59 = scmp.ne.s32.totalorder %s50, %s51
      %p60 = scmp.eq.s32.totalorder %s19, 0
      %p61 = por %p59, %p60
      %p62 = scmp.ne.s32.totalorder %s50, %s51
      %p63 = scmp.eq.s32.totalorder %s20, 3
      %p64 = por %p62, %p63
      %p66 = scmp.ne.s32.totalorder %s51, %s65
      %p67 = scmp.eq.s32.totalorder %s20, 0
      %p68 = por %p66, %p67
      %s70 = sadd.s32 %s69, 1
      %p73 = scmp.eq.s32.totalorder %s14, 3
      %p74 = scmp.ne.s32.totalorder %s69, %s71
      %p75 = scmp.eq.s32.totalorder %s14, 0
      %p76 = por %p74, %p75
      %p77 = scmp.ne.s32.totalorder %s69, %s71
      %p78 = scmp.eq.s32.totalorder %s19, 3
      %p79 = por %p77, %p78
      %p80 = scmp.ne.s32.totalorder %s71, %s72
      %p81 = scmp.eq.s32.totalorder %s19, 0
      %p82 = por %p80, %p81
      %p83 = scmp.ne.s32.totalorder %s71, %s72
      %p84 = scmp.eq.s32.totalorder %s20, 3
      %p85 = por %p83, %p84
      %p87 = scmp.ne.s32.totalorder %s72, %s86
      %p88 = scmp.eq.s32.totalorder %s20, 0
      %p89 = por %p87, %p88
      %s91 = sadd.s32 %s90, 1
      %p94 = scmp.eq.s32.totalorder %s14, 3
      %p95 = scmp.ne.s32.totalorder %s90, %s92
      %p96 = scmp.eq.s32.totalorder %s14, 0
      %p97 = por %p95, %p96
      %p98 = scmp.ne.s32.totalorder %s90, %s92
      %p99 = scmp.eq.s32.totalorder %s19, 3
      %p100 = por %p98, %p99
      %p101 = scmp.ne.s32.totalorder %s92, %s93
      %p102 = scmp.eq.s32.totalorder %s19, 0
      %p103 = por %p101, %p102
      %p104 = scmp.ne.s32.totalorder %s92, %s93
      %p105 = scmp.eq.s32.totalorder %s20, 3
      %p106 = por %p104, %p105
      %p108 = scmp.ne.s32.totalorder %s93, %s107
      %p109 = scmp.eq.s32.totalorder %s20, 0
      %p110 = por %p108, %p109
      %s112 = sadd.s32 %s111, 1
      %p115 = scmp.eq.s32.totalorder %s14, 3
      %p116 = scmp.ne.s32.totalorder %s111, %s113
      %p117 = scmp.eq.s32.totalorder %s14, 0
      %p118 = por %p116, %p117
      %p119 = scmp.ne.s32.totalorder %s111, %s113
      %p120 = scmp.eq.s32.totalorder %s19, 3
      %p121 = por %p119, %p120
      %p122 = scmp.ne.s32.totalorder %s113, %s114
      %p123 = scmp.eq.s32.totalorder %s19, 0
      %p124 = por %p122, %p123
      %p125 = scmp.ne.s32.totalorder %s113, %s114
      %p126 = scmp.eq.s32.totalorder %s20, 3
      %p127 = por %p125, %p126
      %p129 = scmp.ne.s32.totalorder %s114, %s128
      %p130 = scmp.eq.s32.totalorder %s20, 0
      %p131 = por %p129, %p130
      %s133 = sadd.s32 %s132, 1
      %p136 = scmp.eq.s32.totalorder %s14, 3
      %p137 = scmp.ne.s32.totalorder %s132, %s134
      %p138 = scmp.eq.s32.totalorder %s14, 0
      %p139 = por %p137, %p138
      %p140 = scmp.ne.s32.totalorder %s132, %s134
      %p141 = scmp.eq.s32.totalorder %s19, 3
      %p142 = por %p140, %p141
      %p143 = scmp.ne.s32.totalorder %s134, %s135
      %p144 = scmp.eq.s32.totalorder %s19, 0
      %p145 = por %p143, %p144
      %p146 = scmp.ne.s32.totalorder %s134, %s135
      %p147 = scmp.eq.s32.totalorder %s20, 3
      %p148 = por %p146, %p147
      %p150 = scmp.ne.s32.totalorder %s135, %s149
      %p151 = scmp.eq.s32.totalorder %s20, 0
      %p152 = por %p150, %p151
      %s154 = sadd.s32 %s153, 1
      %p157 = scmp.eq.s32.totalorder %s14, 3
      %p158 = scmp.ne.s32.totalorder %s153, %s155
      %p159 = scmp.eq.s32.totalorder %s14, 0
      %p160 = por %p158, %p159
      %p161 = scmp.ne.s32.totalorder %s153, %s155
      %p162 = scmp.eq.s32.totalorder %s19, 3
      %p163 = por %p161, %p162
      %p164 = scmp.ne.s32.totalorder %s155, %s156
      %p165 = scmp.eq.s32.totalorder %s19, 0
      %p166 = por %p164, %p165
      %p167 = scmp.ne.s32.totalorder %s155, %s156
      %p168 = scmp.eq.s32.totalorder %s20, 3
      %p169 = por %p167, %p168
      %p171 = scmp.ne.s32.totalorder %s156, %s170
      %p172 = scmp.eq.s32.totalorder %s20, 0
      %p173 = por %p171, %p172
      %s174 = ssub.s32 %s14, %s21
      %p175 = scmp.eq.s32.totalorder %s174, 0
      %s177 = sadd.s32 %s176, 1
      %s178 = scalar_select %p175, %s176, %s177
      %p181 = pneg %p175
      %p182 = scmp.eq.s32.totalorder %s14, 3
      %p183 = por %p181, %p182
      %p184 = scmp.ne.s32.totalorder %s176, %s179
      %p185 = scmp.eq.s32.totalorder %s14, 0
      %p186 = por %p184, %p185
      %p187 = scmp.ne.s32.totalorder %s176, %s179
      %p188 = scmp.eq.s32.totalorder %s19, 3
      %p189 = por %p187, %p188
      %p190 = scmp.ne.s32.totalorder %s179, %s180
      %p191 = scmp.eq.s32.totalorder %s19, 0
      %p192 = por %p190, %p191
      %p193 = scmp.ne.s32.totalorder %s179, %s180
      %p194 = scmp.eq.s32.totalorder %s20, 3
      %p195 = por %p193, %p194
      %p197 = scmp.ne.s32.totalorder %s180, %s196
      %p198 = scmp.eq.s32.totalorder %s20, 0
      %p199 = por %p197, %p198
      %p200 = scmp.le.s32.totalorder 1, %s14
      %p201 = scmp.lt.s32.totalorder %s14, 5
      %p202 = pnand %p200, %p201
      %p203 = pneg %p202
      // Predicated region
      $region9: #{classifier_mlp_forward.1} parent=5 // pred_check
        _
      $region10: #{classifier_mlp_forward.1} parent=5 // pred_check_branch
        %205 = sbr.rel (%p202) target = $region12
      $region11: #{classifier_mlp_forward.1} parent=5 // pred_region
        %s206 = ssub.s32 %s14, 1
        // Predicated region
        $region13: #{classifier_mlp_forward.1} parent=11 // pred_check
          %p207 = pneg %p61
        $region14: #{classifier_mlp_forward.1} parent=11 // pred_check_branch
          %209 = sbr.rel (%p207) target = $region16
        $region15: #{classifier_mlp_forward.1} parent=11 // pred_region
          _
        $region16: #{classifier_mlp_forward.1} parent=11 // pred_fallthru
          _
        // Predicated region
        $region17: #{classifier_mlp_forward.1} parent=11 // pred_check
          %p210 = pneg %p82
        $region18: #{classifier_mlp_forward.1} parent=11 // pred_check_branch
          %212 = sbr.rel (%p210) target = $region20
        $region19: #{classifier_mlp_forward.1} parent=11 // pred_region
          _
        $region20: #{classifier_mlp_forward.1} parent=11 // pred_fallthru
          _
        // Predicated region
        $region21: #{classifier_mlp_forward.1} parent=11 // pred_check
          %p213 = pneg %p103
        $region22: #{classifier_mlp_forward.1} parent=11 // pred_check_branch
          %215 = sbr.rel (%p213) target = $region24
        $region23: #{classifier_mlp_forward.1} parent=11 // pred_region
          %s217 = ssub.s32 2048, 2048
          %218 = vsyncadd [#allocation3], %s217
          %s219 = sshll.u32 [#allocation2], 4
          %s220 = int_to_ptr.vmem [resolvable:$true] %s219
          %225 = dma.hbm_to_vmem [thread:$0]  %s3, 2048, %s220, [#allocation3], 64, 64, 4
        $region24: #{classifier_mlp_forward.1} parent=11 // pred_fallthru
          _
        // Predicated region
        $region25: #{classifier_mlp_forward.1} parent=11 // pred_check
          %p226 = pneg %p124
        $region26: #{classifier_mlp_forward.1} parent=11 // pred_check_branch
          %228 = sbr.rel (%p226) target = $region28
        $region27: #{classifier_mlp_forward.1} parent=11 // pred_region
          _
        $region28: #{classifier_mlp_forward.1} parent=11 // pred_fallthru
          _
        // Predicated region
        $region29: #{classifier_mlp_forward.1} parent=11 // pred_check
          %p229 = pneg %p145
        $region30: #{classifier_mlp_forward.1} parent=11 // pred_check_branch
          %231 = sbr.rel (%p229) target = $region32
        $region31: #{classifier_mlp_forward.1} parent=11 // pred_region
          _
        $region32: #{classifier_mlp_forward.1} parent=11 // pred_fallthru
          _
        // Predicated region
        $region33: #{classifier_mlp_forward.1} parent=11 // pred_check
          %p232 = pneg %p166
        $region34: #{classifier_mlp_forward.1} parent=11 // pred_check_branch
          %234 = sbr.rel (%p232) target = $region36
        $region35: #{classifier_mlp_forward.1} parent=11 // pred_region
          _
        $region36: #{classifier_mlp_forward.1} parent=11 // pred_fallthru
          _
      $region12: #{classifier_mlp_forward.1} parent=5 // pred_fallthru
        _
      %p235 = scmp.lt.s32.totalorder %s14, 4
      // Predicated region
      $region37: #{classifier_mlp_forward.1} parent=5 // pred_check
        %p236 = pneg %p235
      $region38: #{classifier_mlp_forward.1} parent=5 // pred_check_branch
        %238 = sbr.rel (%p236) target = $region40
      $region39: #{classifier_mlp_forward.1} parent=5 // pred_region
        // Predicated region
        $region41: #{classifier_mlp_forward.1} parent=39 // pred_check
          %p239 = pneg %p34
        $region42: #{classifier_mlp_forward.1} parent=39 // pred_check_branch
          %241 = sbr.rel (%p239) target = $region44
        $region43: #{classifier_mlp_forward.1} parent=39 // pred_region
          %p242 = scmp.lt.s32.totalorder %s14, 3
          %s243 = scalar_select %p242, %s14, 3
          %s244 = smul.addr %s243, 8
          %s245 = scalar_lea.vmem %s0, %s244
        $region44: #{classifier_mlp_forward.1} parent=39 // pred_fallthru
          _
      $region40: #{classifier_mlp_forward.1} parent=5 // pred_fallthru
        _
      %p246 = scmp.le.s32.totalorder 1, %s14
      %p247 = scmp.lt.s32.totalorder %s14, 5
      %p248 = pnand %p246, %p247
      %p249 = pneg %p248
      // Predicated region
      $region45: #{classifier_mlp_forward.1} parent=5 // pred_check
        _
      $region46: #{classifier_mlp_forward.1} parent=5 // pred_check_branch
        %251 = sbr.rel (%p248) target = $region48
      $region47: #{classifier_mlp_forward.1} parent=5 // pred_region
        %s252 = ssub.s32 %s14, 1
        // Predicated region
        $region49: #{classifier_mlp_forward.1} parent=47 // pred_check
          %p253 = pneg %p103
        $region50: #{classifier_mlp_forward.1} parent=47 // pred_check_branch
          %255 = sbr.rel (%p253) target = $region52
        $region51: #{classifier_mlp_forward.1} parent=47 // pred_region
          %256 = dma.done [#allocation3], 2048
        $region52: #{classifier_mlp_forward.1} parent=47 // pred_fallthru
          _
        %p257 = scmp.lt.s32.totalorder %s19, 3
        %s258 = scalar_select %p257, %s19, 3
        %s259 = smul.addr %s258, 8
        %s260 = scalar_lea.vmem %s0, %s259
        %p261 = pneg %p40
        %p262 = pneg %p37
        %p263 = pneg %p61
        %p264 = pneg %p58
        %p265 = pneg %p82
        %p266 = pneg %p79
        %p267 = pneg %p103
        %p268 = pneg %p100
        %p269 = pneg %p124
        %p270 = pneg %p121
        %p271 = pneg %p145
        %p272 = pneg %p142
        %p273 = pneg %p166
        %p274 = pneg %p163
        %p275 = pneg %p192
        %p276 = pneg %p189
        %p277 = scmp.lt.s32.totalorder %s19, 3
        %s278 = scalar_select %p277, %s19, 3
        %s279 = smul.addr %s278, 8
        %s280 = scalar_lea.vmem %s7, %s279
        %p281 = scmp.lt.s32.totalorder %s19, 3
        %s282 = scalar_select %p281, %s19, 3
        %s283 = smul.addr %s282, 8
        %s284 = scalar_lea.vmem %s0, %s283
        %p285 = scmp.lt.s32.totalorder %s19, 3
        %s286 = scalar_select %p285, %s19, 3
        %s287 = smul.addr %s286, 8
        %s288 = scalar_lea.vmem %s7, %s287
        %v290 = vld [vmem:[%s284] sm:$0xff]
        %v291 = vpack.c.bf16 %v290, %v290
        %v292 = vld [vmem:[%s1] sm:$0xff]
        %v293 = vld [vmem:[%s1 + $0x8] sm:$0xff]
        %v294 = vld [vmem:[%s1 + $0x10] sm:$0xff]
        %v295 = vld [vmem:[%s1 + $0x18] sm:$0xff]
        %v296 = vld [vmem:[%s2] sm:$0x3]
        %v298 = vlaneseq
        %v299 = vshrl.u32 %v298, 7
        %v300 = vsub.s32 0, %v299
        %v301 = vrot.slane %v296, %v300
        %v302 = vlaneseq
        %v303 = vshrl.u32 %v302, 7
        %v304 = vsub.s32 1, %v303
        %v305 = vrot.slane %v296, %v304
        %v312 = vunpack.c.l.b16 %v292
        %v313 = vunpack.c.h.b16 %v292
        %v314 = vunpack.c.l.b16 %v293
        %v315 = vunpack.c.h.b16 %v293
        %v316 = vunpack.c.l.b16 %v294
        %v317 = vunpack.c.h.b16 %v294
        %v318 = vunpack.c.l.b16 %v295
        %v319 = vunpack.c.h.b16 %v295
        %v320 = vpack.c.b16 %v314, %v312
        %v321 = vpack.c.b16 %v315, %v313
        %v322 = vpack.c.b16 %v318, %v316
        %v323 = vpack.c.b16 %v319, %v317
        %vm328 = vcmask 261120
        %v330 = vsel %vm328, %v291, 0
        %332 = vmatprep.subr.bf16.mxu0 0
        %333 = vmatpush1.bf16.msra.mxu0 0
        %334 = vmatprep.subr.bf16.mxu0 0
        %335 = vmatpush1.bf16.msra.mxu0 0
        %336 = vmatprep.subr.bf16.mxu0 0
        %337 = vmatpush1.bf16.msra.mxu0 0
        %338 = vmatprep.subr.bf16.mxu0 0
        %339 = vmatpush1.bf16.msra.mxu0 0
        %340 = vmatprep.subr.bf16.mxu0 0
        %341 = vmatpush1.bf16.msra.mxu0 0
        %342 = vmatprep.subr.bf16.mxu0 0
        %343 = vmatpush1.bf16.msra.mxu0 0
        %344 = vmatprep.subr.bf16.mxu0 %v323
        %345 = vmatpush1.bf16.msra.mxu0 %v322
        %346 = vmatprep.subr.bf16.mxu0 %v321
        %347 = vmatpush1.bf16.msra.mxu0 %v320
        %348 = vmatprep.subr.bf16.mxu0 0
        %349 = vmatpush2.bf16.msra.mxu0 0
        %350 = vmatprep.subr.bf16.mxu0 0
        %351 = vmatpush2.bf16.msra.mxu0 0
        %352 = vmatprep.subr.bf16.mxu0 0
        %353 = vmatpush2.bf16.msra.mxu0 0
        %354 = vmatprep.subr.bf16.mxu0 0
        %355 = vmatpush2.bf16.msra.mxu0 0
        %356 = vmatprep.subr.bf16.mxu0 0
        %357 = vmatpush2.bf16.msra.mxu0 0
        %358 = vmatprep.subr.bf16.mxu0 0
        %359 = vmatpush2.bf16.msra.mxu0 0
        %360 = vmatprep.subr.bf16.mxu0 0
        %361 = vmatpush2.bf16.msra.mxu0 0
        %362 = vmatprep.subr.bf16.mxu0 0
        %363 = vmatpush2.bf16.msra.mxu0 0
        %364 = vmatprep.mubr.bf16.mxu0 0
        %365 = vmatmul.mubr.bf16.gmra.mxu0 %v330
        %v366 = vpop.f32.mrf.mxu0
        %v367 = vadd.f32 %v301, %v366
        %v368 = vpop.f32.mrf.mxu0
        %v369 = vadd.f32 %v305, %v368
        %v370 = vpop.f32.mrf.mxu0
        %v371 = vpop.f32.mrf.mxu0
        %372 = vdwg.mxu0
        %v373 = vmax.f32 %v367, 0.0
        %v374 = vmax.f32 %v369, 0.0
        %v375 = vpack.c.bf16 %v373, %v373
        %v376 = vpack.c.bf16 %v374, %v374
        %v377 = vld [vmem:[#allocation2] sm:$0xf]
        %v378 = vld [vmem:[#allocation2 + $0x4] sm:$0xf]
        %v379 = vld [vmem:[#allocation2 + $0x8] sm:$0xf]
        %v380 = vld [vmem:[#allocation2 + $0xc] sm:$0xf]
        %v381 = vld [vmem:[#allocation2 + $0x10] sm:$0xf]
        %v382 = vld [vmem:[#allocation2 + $0x14] sm:$0xf]
        %v383 = vld [vmem:[#allocation2 + $0x18] sm:$0xf]
        %v384 = vld [vmem:[#allocation2 + $0x1c] sm:$0xf]
        %v385 = vld [vmem:[#allocation2 + $0x20] sm:$0xf]
        %v386 = vld [vmem:[#allocation2 + $0x24] sm:$0xf]
        %v387 = vld [vmem:[#allocation2 + $0x28] sm:$0xf]
        %v388 = vld [vmem:[#allocation2 + $0x2c] sm:$0xf]
        %v389 = vld [vmem:[#allocation2 + $0x30] sm:$0xf]
        %v390 = vld [vmem:[#allocation2 + $0x34] sm:$0xf]
        %v391 = vld [vmem:[#allocation2 + $0x38] sm:$0xf]
        %v392 = vld [vmem:[#allocation2 + $0x3c] sm:$0xf]
        %v393 = vld [vmem:[#allocation2 + $0x40] sm:$0xf]
        %v394 = vld [vmem:[#allocation2 + $0x44] sm:$0xf]
        %v395 = vld [vmem:[#allocation2 + $0x48] sm:$0xf]
        %v396 = vld [vmem:[#allocation2 + $0x4c] sm:$0xf]
        %v397 = vld [vmem:[#allocation2 + $0x50] sm:$0xf]
        %v398 = vld [vmem:[#allocation2 + $0x54] sm:$0xf]
        %v399 = vld [vmem:[#allocation2 + $0x58] sm:$0xf]
        %v400 = vld [vmem:[#allocation2 + $0x5c] sm:$0xf]
        %v401 = vld [vmem:[#allocation2 + $0x60] sm:$0xf]
        %v402 = vld [vmem:[#allocation2 + $0x64] sm:$0xf]
        %v403 = vld [vmem:[#allocation2 + $0x68] sm:$0xf]
        %v404 = vld [vmem:[#allocation2 + $0x6c] sm:$0xf]
        %v405 = vld [vmem:[#allocation2 + $0x70] sm:$0xf]
        %v406 = vld [vmem:[#allocation2 + $0x74] sm:$0xf]
        %v407 = vld [vmem:[#allocation2 + $0x78] sm:$0xf]
        %v408 = vld [vmem:[#allocation2 + $0x7c] sm:$0xf]
        %v409 = vld [vmem:[%s4] sm:$0x1]
        %v411 = vlaneseq
        %v412 = vshrl.u32 %v411, 7
        %v413 = vsub.s32 0, %v412
        %v414 = vrot.slane %v409, %v413
        %v448 = vunpack.c.l.b16 %v377
        %v449 = vunpack.c.l.b16 %v378
        %v450 = vunpack.c.l.b16 %v379
        %v451 = vunpack.c.l.b16 %v380
        %v452 = vunpack.c.l.b16 %v381
        %v453 = vunpack.c.l.b16 %v382
        %v454 = vunpack.c.l.b16 %v383
        %v455 = vunpack.c.l.b16 %v384
        %v456 = vunpack.c.l.b16 %v385
        %v457 = vunpack.c.l.b16 %v386
        %v458 = vunpack.c.l.b16 %v387
        %v459 = vunpack.c.l.b16 %v388
        %v460 = vunpack.c.l.b16 %v389
        %v461 = vunpack.c.l.b16 %v390
        %v462 = vunpack.c.l.b16 %v391
        %v463 = vunpack.c.l.b16 %v392
        %v464 = vunpack.c.l.b16 %v393
        %v465 = vunpack.c.l.b16 %v394
        %v466 = vunpack.c.l.b16 %v395
        %v467 = vunpack.c.l.b16 %v396
        %v468 = vunpack.c.l.b16 %v397
        %v469 = vunpack.c.l.b16 %v398
        %v470 = vunpack.c.l.b16 %v399
        %v471 = vunpack.c.l.b16 %v400
        %v472 = vunpack.c.l.b16 %v401
        %v473 = vunpack.c.l.b16 %v402
        %v474 = vunpack.c.l.b16 %v403
        %v475 = vunpack.c.l.b16 %v404
        %v476 = vunpack.c.l.b16 %v405
        %v477 = vunpack.c.l.b16 %v406
        %v478 = vunpack.c.l.b16 %v407
        %v479 = vunpack.c.l.b16 %v408
        %v480 = vpack.c.b16 %v449, %v448
        %v481 = vpack.c.b16 %v451, %v450
        %v482 = vpack.c.b16 %v453, %v452
        %v483 = vpack.c.b16 %v455, %v454
        %v484 = vpack.c.b16 %v457, %v456
        %v485 = vpack.c.b16 %v459, %v458
        %v486 = vpack.c.b16 %v461, %v460
        %v487 = vpack.c.b16 %v463, %v462
        %v488 = vpack.c.b16 %v465, %v464
        %v489 = vpack.c.b16 %v467, %v466
        %v490 = vpack.c.b16 %v469, %v468
        %v491 = vpack.c.b16 %v471, %v470
        %v492 = vpack.c.b16 %v473, %v472
        %v493 = vpack.c.b16 %v475, %v474
        %v494 = vpack.c.b16 %v477, %v476
        %v495 = vpack.c.b16 %v479, %v478
        %512 = vmatprep.subr.bf16.mxu0 0
        %513 = vmatpush1.bf16.msra.mxu0 %v487
        %514 = vmatprep.subr.bf16.mxu0 0
        %515 = vmatpush1.bf16.msra.mxu0 %v486
        %516 = vmatprep.subr.bf16.mxu0 0
        %517 = vmatpush1.bf16.msra.mxu0 %v485
        %518 = vmatprep.subr.bf16.mxu0 0
        %519 = vmatpush1.bf16.msra.mxu0 %v484
        %520 = vmatprep.subr.bf16.mxu0 0
        %521 = vmatpush1.bf16.msra.mxu0 %v483
        %522 = vmatprep.subr.bf16.mxu0 0
        %523 = vmatpush1.bf16.msra.mxu0 %v482
        %524 = vmatprep.subr.bf16.mxu0 0
        %525 = vmatpush1.bf16.msra.mxu0 %v481
        %526 = vmatprep.subr.bf16.mxu0 0
        %527 = vmatpush1.bf16.msra.mxu0 %v480
        %528 = vmatprep.subr.bf16.mxu0 0
        %529 = vmatpush2.bf16.msra.mxu0 %v495
        %530 = vmatprep.subr.bf16.mxu0 0
        %531 = vmatpush2.bf16.msra.mxu0 %v494
        %532 = vmatprep.subr.bf16.mxu0 0
        %533 = vmatpush2.bf16.msra.mxu0 %v493
        %534 = vmatprep.subr.bf16.mxu0 0
        %535 = vmatpush2.bf16.msra.mxu0 %v492
        %536 = vmatprep.subr.bf16.mxu0 0
        %537 = vmatpush2.bf16.msra.mxu0 %v491
        %538 = vmatprep.subr.bf16.mxu0 0
        %539 = vmatpush2.bf16.msra.mxu0 %v490
        %540 = vmatprep.subr.bf16.mxu0 0
        %541 = vmatpush2.bf16.msra.mxu0 %v489
        %542 = vmatprep.subr.bf16.mxu0 0
        %543 = vmatpush2.bf16.msra.mxu0 %v488
        %544 = vmatprep.mubr.bf16.mxu0 %v376
        %545 = vmatmul.mubr.bf16.gmra.mxu0 %v375
        %v546 = vpop.f32.mrf.mxu0
        %v547 = vadd.f32 %v414, %v546
        %v548 = vpop.f32.mrf.mxu0
        %v549 = vpop.f32.mrf.mxu0
        %v550 = vpop.f32.mrf.mxu0
        %551 = vdwg.mxu0
        %v552 = vmax.f32 %v547, 0.0
        %v553 = vpack.c.bf16 %v552, %v552
        %v554 = vld [vmem:[%s5] sm:$0xf]
        %v555 = vld [vmem:[%s5 + $0x4] sm:$0xf]
        %v556 = vld [vmem:[%s5 + $0x8] sm:$0xf]
        %v557 = vld [vmem:[%s5 + $0xc] sm:$0xf]
        %v558 = vld [vmem:[%s5 + $0x10] sm:$0xf]
        %v559 = vld [vmem:[%s5 + $0x14] sm:$0xf]
        %v560 = vld [vmem:[%s5 + $0x18] sm:$0xf]
        %v561 = vld [vmem:[%s5 + $0x1c] sm:$0xf]
        %v562 = vld [vmem:[%s5 + $0x20] sm:$0xf]
        %v563 = vld [vmem:[%s5 + $0x24] sm:$0xf]
        %v564 = vld [vmem:[%s5 + $0x28] sm:$0xf]
        %v565 = vld [vmem:[%s5 + $0x2c] sm:$0xf]
        %v566 = vld [vmem:[%s5 + $0x30] sm:$0xf]
        %v567 = vld [vmem:[%s5 + $0x34] sm:$0xf]
        %v568 = vld [vmem:[%s5 + $0x38] sm:$0xf]
        %v569 = vld [vmem:[%s5 + $0x3c] sm:$0xf]
        %v570 = vld [vmem:[%s6] sm:$0x1]
        %v572 = vlaneseq
        %v573 = vshrl.u32 %v572, 7
        %v574 = vsub.s32 0, %v573
        %v575 = vrot.slane %v570, %v574
        %v593 = vunpack.c.l.b16 %v554
        %v594 = vunpack.c.l.b16 %v555
        %v595 = vunpack.c.l.b16 %v556
        %v596 = vunpack.c.l.b16 %v557
        %v597 = vunpack.c.l.b16 %v558
        %v598 = vunpack.c.l.b16 %v559
        %v599 = vunpack.c.l.b16 %v560
        %v600 = vunpack.c.l.b16 %v561
        %v601 = vunpack.c.l.b16 %v562
        %v602 = vunpack.c.l.b16 %v563
        %v603 = vunpack.c.l.b16 %v564
        %v604 = vunpack.c.l.b16 %v565
        %v605 = vunpack.c.l.b16 %v566
        %v606 = vunpack.c.l.b16 %v567
        %v607 = vunpack.c.l.b16 %v568
        %v608 = vunpack.c.l.b16 %v569
        %v609 = vpack.c.b16 %v594, %v593
        %v610 = vpack.c.b16 %v596, %v595
        %v611 = vpack.c.b16 %v598, %v597
        %v612 = vpack.c.b16 %v600, %v599
        %v613 = vpack.c.b16 %v602, %v601
        %v614 = vpack.c.b16 %v604, %v603
        %v615 = vpack.c.b16 %v606, %v605
        %v616 = vpack.c.b16 %v608, %v607
        %625 = vmatprep.subr.bf16.mxu0 0
        %626 = vmatpush1.bf16.msra.mxu0 %v616
        %627 = vmatprep.subr.bf16.mxu0 0
        %628 = vmatpush1.bf16.msra.mxu0 %v615
        %629 = vmatprep.subr.bf16.mxu0 0
        %630 = vmatpush1.bf16.msra.mxu0 %v614
        %631 = vmatprep.subr.bf16.mxu0 0
        %632 = vmatpush1.bf16.msra.mxu0 %v613
        %633 = vmatprep.subr.bf16.mxu0 0
        %634 = vmatpush1.bf16.msra.mxu0 %v612
        %635 = vmatprep.subr.bf16.mxu0 0
        %636 = vmatpush1.bf16.msra.mxu0 %v611
        %637 = vmatprep.subr.bf16.mxu0 0
        %638 = vmatpush1.bf16.msra.mxu0 %v610
        %639 = vmatprep.subr.bf16.mxu0 0
        %640 = vmatpush1.bf16.msra.mxu0 %v609
        %641 = vmatprep.subr.bf16.mxu0 0
        %642 = vmatpush2.bf16.msra.mxu0 0
        %643 = vmatprep.subr.bf16.mxu0 0
        %644 = vmatpush2.bf16.msra.mxu0 0
        %645 = vmatprep.subr.bf16.mxu0 0
        %646 = vmatpush2.bf16.msra.mxu0 0
        %647 = vmatprep.subr.bf16.mxu0 0
        %648 = vmatpush2.bf16.msra.mxu0 0
        %649 = vmatprep.subr.bf16.mxu0 0
        %650 = vmatpush2.bf16.msra.mxu0 0
        %651 = vmatprep.subr.bf16.mxu0 0
        %652 = vmatpush2.bf16.msra.mxu0 0
        %653 = vmatprep.subr.bf16.mxu0 0
        %654 = vmatpush2.bf16.msra.mxu0 0
        %655 = vmatprep.subr.bf16.mxu0 0
        %656 = vmatpush2.bf16.msra.mxu0 0
        %657 = vmatprep.mubr.bf16.mxu0 0
        %658 = vmatmul.mubr.bf16.gmra.mxu0 %v553
        %v659 = vpop.f32.mrf.mxu0
        %v660 = vadd.f32 %v575, %v659
        %v661 = vpop.f32.mrf.mxu0
        %v662 = vpop.f32.mrf.mxu0
        %v663 = vpop.f32.mrf.mxu0
        %664 = vdwg.mxu0
        %vm665 = vcmask 80896
        %666 = vst.msk [vmem:[%s288] sm:$0xff] %vm665, %v660
        %p667 = scmp.lt.s32.totalorder %s19, 3
        %s668 = scalar_select %p667, %s19, 3
        %s669 = smul.addr %s668, 8
        %s670 = scalar_lea.vmem %s7, %s669
        // Predicated region
        $region53: #{classifier_mlp_forward.1} parent=47 // pred_check
          %p671 = pneg %p189
        $region54: #{classifier_mlp_forward.1} parent=47 // pred_check_branch
          %673 = sbr.rel (%p671) target = $region56
        $region55: #{classifier_mlp_forward.1} parent=47 // pred_region
          _
        $region56: #{classifier_mlp_forward.1} parent=47 // pred_fallthru
          _
      $region48: #{classifier_mlp_forward.1} parent=5 // pred_fallthru
        _
      %p674 = scmp.le.s32.totalorder 2, %s14
      // Predicated region
      $region57: #{classifier_mlp_forward.1} parent=5 // pred_check
        %p675 = pneg %p674
      $region58: #{classifier_mlp_forward.1} parent=5 // pred_check_branch
        %677 = sbr.rel (%p675) target = $region60
      $region59: #{classifier_mlp_forward.1} parent=5 // pred_region
        %s678 = ssub.s32 %s14, 2
        // Predicated region
        $region61: #{classifier_mlp_forward.1} parent=59 // pred_check
          %p679 = pneg %p195
        $region62: #{classifier_mlp_forward.1} parent=59 // pred_check_branch
          %681 = sbr.rel (%p679) target = $region64
        $region63: #{classifier_mlp_forward.1} parent=59 // pred_region
          %p682 = scmp.lt.s32.totalorder %s20, 3
          %s683 = scalar_select %p682, %s20, 3
          %s684 = smul.addr %s683, 8
          %s685 = scalar_lea.vmem %s7, %s684
        $region64: #{classifier_mlp_forward.1} parent=59 // pred_fallthru
          _
      $region60: #{classifier_mlp_forward.1} parent=5 // pred_fallthru
        _
    $region6: #{classifier_mlp_forward.1} parent=1 // loop_footer
      %s18 = sadd.s32 1, %s14
    $region7: #{classifier_mlp_forward.1} parent=1 // loop_footer_branch
      %13 = sbr.rel target = $region3
    $region8: #{classifier_mlp_forward.1} parent=1 // loop_exit
      _
    %686 = vsyncpa [#allocation3], 1
    %s687 = scalar_lea.sflag [#allocation3], 1
    %688 = vsyncpa %s687, 1

</llo_original>
